<compile_context>
chip_gen: v5e
topology: v5e:2x2
jax: 0.10.0
libtpu: 0.0.40
codegen_flags: <defaults>
</compile_context>

<pallas_src>
import jax
import jax.numpy as jnp
from jax.experimental import pallas as pl
from jax.experimental.pallas import tpu as pltpu


def _round_up(x, m):
    return (x + m - 1) // m * m


def _mlp_kernel(x_ref, w1_ref, b1_ref, w2_ref, b2_ref, o_ref):
    # fc1: (TM, Cin) @ (Cin, H) -> f32 accumulators on the MXU.
    h = jnp.dot(x_ref[...], w1_ref[...], preferred_element_type=jnp.float32)
    # bias + ReLU in f32 (free VALU filler under the MXU work).
    h = jnp.maximum(h + b1_ref[...], 0.0)
    # dropout(p=0.0) -> identity
    # fc2: (TM, H) @ (H, Cout) -> f32 accumulators.
    o = jnp.dot(h.astype(w2_ref.dtype), w2_ref[...], preferred_element_type=jnp.float32)
    o = o + b2_ref[...]
    # dropout(p=0.0) -> identity
    o_ref[...] = o.astype(o_ref.dtype)


def mlp_pallas(x, w1, b1, w2, b2, *, tile_rows=256, compute_dtype=jnp.bfloat16,
               single_buffer_weights=True):
    """x: (..., in_features). Weights in 'math' layout:
       w1: (in, hidden), b1: (hidden,), w2: (hidden, out), b2: (out,)."""
    orig_shape = x.shape
    out_dtype = x.dtype
    cin = orig_shape[-1]
    hidden = w1.shape[1]
    cout = w2.shape[1]

    # Lane-dense (128-aligned) feature dims; zero padding is numerically exact.
    cin_p = _round_up(cin, 128)
    hid_p = _round_up(hidden, 128)
    cout_p = _round_up(cout, 128)

    x2d = x.reshape(-1, cin)
    rows = x2d.shape[0]

    # Row tile: multiple of 16 (bf16 sublane packing; also satisfies f32's 8),
    # no larger than the (rounded-up) row count.
    row_align = 16
    tr = max(row_align, min(_round_up(int(tile_rows), row_align), _round_up(rows, row_align)))
    grid = (pl.cdiv(rows, tr),)

    # Cast matmul operands to the MXU compute dtype; biases stay f32 for the f32 add.
    x2d = x2d.astype(compute_dtype)
    w1c = w1.astype(compute_dtype)
    w2c = w2.astype(compute_dtype)
    b1f = b1.astype(jnp.float32).reshape(1, hidden)
    b2f = b2.astype(jnp.float32).reshape(1, cout)

    # Pad feature dims only when they are not already 128-aligned.
    if cin_p != cin:
        x2d = jnp.pad(x2d, ((0, 0), (0, cin_p - cin)))
        w1c = jnp.pad(w1c, ((0, cin_p - cin), (0, 0)))
    if hid_p != hidden:
        w1c = jnp.pad(w1c, ((0, 0), (0, hid_p - hidden)))
        b1f = jnp.pad(b1f, ((0, 0), (0, hid_p - hidden)))
        w2c = jnp.pad(w2c, ((0, hid_p - hidden), (0, 0)))
    if cout_p != cout:
        w2c = jnp.pad(w2c, ((0, 0), (0, cout_p - cout)))
        b2f = jnp.pad(b2f, ((0, 0), (0, cout_p - cout)))

    csz = jnp.dtype(compute_dtype).itemsize
    osz = jnp.dtype(out_dtype).itemsize

    flops = 2 * rows * (cin_p * hid_p + hid_p * cout_p)
    bytes_accessed = (rows * cin_p * csz + rows * cout_p * osz
                      + (cin_p * hid_p + hid_p * cout_p) * csz
                      + (hid_p + cout_p) * 4)

    # VMEM working set: double-buffered x/out tiles, (single|double)-buffered weights/biases,
    # plus f32 intermediates; leave 2x headroom, stay well under v7x's 64 MiB.
    wbuf = 1 if single_buffer_weights else 2
    vmem_est = (2 * tr * cin_p * csz
                + 2 * tr * cout_p * osz
                + wbuf * ((cin_p * hid_p + hid_p * cout_p) * csz + (hid_p + cout_p) * 4)
                + tr * hid_p * 4 + tr * cout_p * 4)
    vmem_limit = int(min(56 * 1024 * 1024, max(2 * vmem_est, 32 * 1024 * 1024)))
    # TODO(synk): add a K-tiled reduction path (grid axis over cin/hidden with an f32 VMEM
    # accumulator) for hidden sizes whose weight set no longer fits v7x's 64 MiB VMEM.

    def build(single_buf):
        wmode = pl.Buffered(1) if single_buf else None

        def wspec(shape):
            if wmode is None:
                return pl.BlockSpec(shape, lambda i: (0, 0))
            return pl.BlockSpec(shape, lambda i: (0, 0), pipeline_mode=wmode)

        return pl.pallas_call(
            _mlp_kernel,
            out_shape=jax.ShapeDtypeStruct((rows, cout_p), out_dtype),
            grid_spec=pltpu.PrefetchScalarGridSpec(
                num_scalar_prefetch=0,
                grid=grid,
                in_specs=[
                    pl.BlockSpec((tr, cin_p), lambda i: (i, 0)),   # x row-tile
                    wspec((cin_p, hid_p)),                         # w1 (resident)
                    wspec((1, hid_p)),                             # b1 (f32)
                    wspec((hid_p, cout_p)),                        # w2 (resident)
                    wspec((1, cout_p)),                            # b2 (f32)
                ],
                out_specs=pl.BlockSpec((tr, cout_p), lambda i: (i, 0)),
            ),
            compiler_params=pltpu.CompilerParams(
                dimension_semantics=("parallel",),
                vmem_limit_bytes=vmem_limit,
            ),
            cost_estimate=pl.CostEstimate(
                flops=flops, transcendentals=0, bytes_accessed=int(bytes_accessed)),
        )

    try:
        out = build(single_buffer_weights)(x2d, w1c, b1f, w2c, b2f)
    except Exception:
        if not single_buffer_weights:
            raise
        # Fallback: default double-buffered weight specs.
        out = build(False)(x2d, w1c, b1f, w2c, b2f)

    return out[:, :cout].reshape(*orig_shape[:-1], cout)


def init_mlp_params(key, in_features, hidden_features=None, out_features=None,
                    dtype=jnp.float32):
    """Mirrors nn.Linear default init (uniform(+-1/sqrt(fan_in))); weights stored
       transposed relative to PyTorch: (fan_in, fan_out)."""
    out_features = out_features or in_features
    hidden_features = hidden_features or in_features
    k1, k2, k3, k4 = jax.random.split(key, 4)
    bound1 = 1.0 / (in_features ** 0.5)
    bound2 = 1.0 / (hidden_features ** 0.5)
    w1 = jax.random.uniform(k1, (in_features, hidden_features), dtype, -bound1, bound1)
    b1 = jax.random.uniform(k2, (hidden_features,), dtype, -bound1, bound1)
    w2 = jax.random.uniform(k3, (hidden_features, out_features), dtype, -bound2, bound2)
    b2 = jax.random.uniform(k4, (out_features,), dtype, -bound2, bound2)
    return w1, b1, w2, b2


def mlp_reference(x, w1, b1, w2, b2):
    h = jnp.maximum(x @ w1 + b1, 0.0)
    return h @ w2 + b2


if __name__ == "__main__":
    key = jax.random.PRNGKey(0)
    kx, kp = jax.random.split(key)

    # Main check: lane-dense (128-aligned) dims, bf16 MXU path with f32 accumulation.
    B, N, C, H = 2, 64, 128, 256
    x = jax.random.normal(kx, (B, N, C), dtype=jnp.float32)
    w1, b1, w2, b2 = init_mlp_params(kp, C, hidden_features=H, out_features=C)

    out = mlp_pallas(x, w1, b1, w2, b2)                     # bf16 compute (default)
    out = jax.block_until_ready(out)
    ref = mlp_reference(x, w1, b1, w2, b2)
    assert out.shape == (B, N, C), out.shape
    assert jnp.allclose(out, ref, atol=3e-2, rtol=3e-2), "bf16 path mismatch vs reference"

    # Secondary check: tiny, non-128-aligned dims in f32 -> exercises the feature-dim
    # padding / partial-tile path with tight tolerance.
    B2, N2, C2, H2 = 2, 8, 32, 64
    x2 = jax.random.normal(jax.random.PRNGKey(1), (B2, N2, C2), dtype=jnp.float32)
    w1b, b1b, w2b, b2b = init_mlp_params(jax.random.PRNGKey(2), C2,
                                         hidden_features=H2, out_features=C2)
    out2 = jax.block_until_ready(
        mlp_pallas(x2, w1b, b1b, w2b, b2b, compute_dtype=jnp.float32))
    ref2 = mlp_reference(x2, w1b, b1b, w2b, b2b)
    assert out2.shape == (B2, N2, C2), out2.shape
    assert jnp.allclose(out2, ref2, atol=1e-4, rtol=1e-4), "f32 path mismatch vs reference"

    print("KERNEL_OK")
</pallas_src>

<mosaic_0001>
module attributes {stable_mosaic.version = 11 : i64} {
  func.func @_mlp_kernel(%arg0: i32, %arg1: memref<128x128xbf16, #tpu.memory_space<vmem>>, %arg2: memref<128x256xbf16, #tpu.memory_space<vmem>>, %arg3: memref<1x256xf32, #tpu.memory_space<vmem>>, %arg4: memref<256x128xbf16, #tpu.memory_space<vmem>>, %arg5: memref<1x128xf32, #tpu.memory_space<vmem>>, %arg6: memref<128x128xf32, #tpu.memory_space<vmem>>) attributes {dimension_semantics = [#tpu.dimension_semantics<parallel>], iteration_bounds = array<i64: 1>, scalar_prefetch = 0 : i64, scratch_operands = 0 : i64, tpu.core_type = #tpu.core_type<tc>, window_params = [{transform_indices = @transform_0, window_bounds = array<i64: 128, 128>}, {pipeline_mode = #tpu.pipeline_mode<synchronous>, transform_indices = @transform_1, window_bounds = array<i64: 128, 256>}, {pipeline_mode = #tpu.pipeline_mode<synchronous>, transform_indices = @transform_2, window_bounds = array<i64: 1, 256>}, {pipeline_mode = #tpu.pipeline_mode<synchronous>, transform_indices = @transform_3, window_bounds = array<i64: 256, 128>}, {pipeline_mode = #tpu.pipeline_mode<synchronous>, transform_indices = @transform_4, window_bounds = array<i64: 1, 128>}, {transform_indices = @transform_5, window_bounds = array<i64: 128, 128>}]} {
    %c0 = arith.constant 0 : index
    %c0_0 = arith.constant 0 : index
    %0 = vector.load %arg1[%c0, %c0_0] : memref<128x128xbf16, #tpu.memory_space<vmem>>, vector<128x128xbf16>
    %c0_1 = arith.constant 0 : index
    %c0_2 = arith.constant 0 : index
    %1 = vector.load %arg2[%c0_1, %c0_2] : memref<128x256xbf16, #tpu.memory_space<vmem>>, vector<128x256xbf16>
    %cst = arith.constant dense<0.000000e+00> : vector<128x256xf32>
    %2 = tpu.matmul %0, %1, %cst {dimension_numbers = #tpu.dot_dimension_numbers<[1], [0], [0], [1], [0, 0, 1, 1], [], []>} : vector<128x128xbf16>, vector<128x256xbf16>, vector<128x256xf32> -> vector<128x256xf32>
    %c0_3 = arith.constant 0 : index
    %c0_4 = arith.constant 0 : index
    %3 = vector.load %arg3[%c0_3, %c0_4] : memref<1x256xf32, #tpu.memory_space<vmem>>, vector<1x256xf32>
    %4 = vector.broadcast %3 : vector<1x256xf32> to vector<128x256xf32>
    %5 = arith.addf %2, %4 : vector<128x256xf32>
    %cst_5 = arith.constant 0.000000e+00 : f32
    %6 = vector.broadcast %cst_5 : f32 to vector<128x256xf32>
    %7 = arith.maximumf %5, %6 : vector<128x256xf32>
    %8 = arith.truncf %7 : vector<128x256xf32> to vector<128x256xbf16>
    %c0_6 = arith.constant 0 : index
    %c0_7 = arith.constant 0 : index
    %9 = vector.load %arg4[%c0_6, %c0_7] : memref<256x128xbf16, #tpu.memory_space<vmem>>, vector<256x128xbf16>
    %cst_8 = arith.constant dense<0.000000e+00> : vector<128x128xf32>
    %10 = tpu.matmul %8, %9, %cst_8 {dimension_numbers = #tpu.dot_dimension_numbers<[1], [0], [0], [1], [0, 0, 1, 1], [], []>} : vector<128x256xbf16>, vector<256x128xbf16>, vector<128x128xf32> -> vector<128x128xf32>
    %c0_9 = arith.constant 0 : index
    %c0_10 = arith.constant 0 : index
    %11 = vector.load %arg5[%c0_9, %c0_10] : memref<1x128xf32, #tpu.memory_space<vmem>>, vector<1x128xf32>
    %12 = vector.broadcast %11 : vector<1x128xf32> to vector<128x128xf32>
    %13 = arith.addf %10, %12 : vector<128x128xf32>
    %c0_11 = arith.constant 0 : index
    %c0_12 = arith.constant 0 : index
    %14 = vector.load %arg6[%c0_11, %c0_12] : memref<128x128xf32, #tpu.memory_space<vmem>>, vector<128x128xf32>
    tpu.vector_store %arg6[%c0_11, %c0_12], %13 {strides = array<i32>} : memref<128x128xf32, #tpu.memory_space<vmem>>, vector<128x128xf32>,
    return
  }
  func.func @transform_0(%arg0: i32) -> (i32, i32) {
    %c0_i32 = arith.constant 0 : i32
    %c0_i32_0 = arith.constant 0 : i32
    return %arg0, %c0_i32 : i32, i32
  }
  func.func @transform_1(%arg0: i32) -> (i32, i32) {
    %c0_i32 = arith.constant 0 : i32
    %c0_i32_0 = arith.constant 0 : i32
    %c0_i32_1 = arith.constant 0 : i32
    return %c0_i32, %c0_i32_0 : i32, i32
  }
  func.func @transform_2(%arg0: i32) -> (i32, i32) {
    %c0_i32 = arith.constant 0 : i32
    %c0_i32_0 = arith.constant 0 : i32
    %c0_i32_1 = arith.constant 0 : i32
    return %c0_i32, %c0_i32_0 : i32, i32
  }
  func.func @transform_3(%arg0: i32) -> (i32, i32) {
    %c0_i32 = arith.constant 0 : i32
    %c0_i32_0 = arith.constant 0 : i32
    %c0_i32_1 = arith.constant 0 : i32
    return %c0_i32, %c0_i32_0 : i32, i32
  }
  func.func @transform_4(%arg0: i32) -> (i32, i32) {
    %c0_i32 = arith.constant 0 : i32
    %c0_i32_0 = arith.constant 0 : i32
    %c0_i32_1 = arith.constant 0 : i32
    return %c0_i32, %c0_i32_0 : i32, i32
  }
  func.func @transform_5(%arg0: i32) -> (i32, i32) {
    %c0_i32 = arith.constant 0 : i32
    %c0_i32_0 = arith.constant 0 : i32
    return %arg0, %c0_i32 : i32, i32
  }
}

module attributes {stable_mosaic.version = 11 : i64} {
  func.func @_mlp_kernel(%arg0: i32, %arg1: memref<128x128xbf16, #tpu.memory_space<vmem>>, %arg2: memref<128x256xbf16, #tpu.memory_space<vmem>>, %arg3: memref<1x256xf32, #tpu.memory_space<vmem>>, %arg4: memref<256x128xbf16, #tpu.memory_space<vmem>>, %arg5: memref<1x128xf32, #tpu.memory_space<vmem>>, %arg6: memref<128x128xf32, #tpu.memory_space<vmem>>) attributes {dimension_semantics = [#tpu.dimension_semantics<parallel>], iteration_bounds = array<i64: 1>, scalar_prefetch = 0 : i64, scratch_operands = 0 : i64, tpu.core_type = #tpu.core_type<tc>, window_params = [{transform_indices = @transform_0, window_bounds = array<i64: 128, 128>}, {pipeline_mode = #tpu.pipeline_mode<synchronous>, transform_indices = @transform_1, window_bounds = array<i64: 128, 256>}, {pipeline_mode = #tpu.pipeline_mode<synchronous>, transform_indices = @transform_2, window_bounds = array<i64: 1, 256>}, {pipeline_mode = #tpu.pipeline_mode<synchronous>, transform_indices = @transform_3, window_bounds = array<i64: 256, 128>}, {pipeline_mode = #tpu.pipeline_mode<synchronous>, transform_indices = @transform_4, window_bounds = array<i64: 1, 128>}, {transform_indices = @transform_5, window_bounds = array<i64: 128, 128>}]} {
    %c0 = arith.constant 0 : index
    %c0_0 = arith.constant 0 : index
    %0 = vector.load %arg1[%c0, %c0_0] : memref<128x128xbf16, #tpu.memory_space<vmem>>, vector<128x128xbf16>
    %c0_1 = arith.constant 0 : index
    %c0_2 = arith.constant 0 : index
    %1 = vector.load %arg2[%c0_1, %c0_2] : memref<128x256xbf16, #tpu.memory_space<vmem>>, vector<128x256xbf16>
    %cst = arith.constant dense<0.000000e+00> : vector<128x256xf32>
    %2 = tpu.matmul %0, %1, %cst {dimension_numbers = #tpu.dot_dimension_numbers<[1], [0], [0], [1], [0, 0, 1, 1], [], []>} : vector<128x128xbf16>, vector<128x256xbf16>, vector<128x256xf32> -> vector<128x256xf32>
    %c0_3 = arith.constant 0 : index
    %c0_4 = arith.constant 0 : index
    %3 = vector.load %arg3[%c0_3, %c0_4] : memref<1x256xf32, #tpu.memory_space<vmem>>, vector<1x256xf32>
    %4 = vector.broadcast %3 : vector<1x256xf32> to vector<128x256xf32>
    %5 = arith.addf %2, %4 : vector<128x256xf32>
    %cst_5 = arith.constant 0.000000e+00 : f32
    %6 = vector.broadcast %cst_5 : f32 to vector<128x256xf32>
    %7 = arith.maximumf %5, %6 : vector<128x256xf32>
    %8 = arith.truncf %7 : vector<128x256xf32> to vector<128x256xbf16>
    %c0_6 = arith.constant 0 : index
    %c0_7 = arith.constant 0 : index
    %9 = vector.load %arg4[%c0_6, %c0_7] : memref<256x128xbf16, #tpu.memory_space<vmem>>, vector<256x128xbf16>
    %cst_8 = arith.constant dense<0.000000e+00> : vector<128x128xf32>
    %10 = tpu.matmul %8, %9, %cst_8 {dimension_numbers = #tpu.dot_dimension_numbers<[1], [0], [0], [1], [0, 0, 1, 1], [], []>} : vector<128x256xbf16>, vector<256x128xbf16>, vector<128x128xf32> -> vector<128x128xf32>
    %c0_9 = arith.constant 0 : index
    %c0_10 = arith.constant 0 : index
    %11 = vector.load %arg5[%c0_9, %c0_10] : memref<1x128xf32, #tpu.memory_space<vmem>>, vector<1x128xf32>
    %12 = vector.broadcast %11 : vector<1x128xf32> to vector<128x128xf32>
    %13 = arith.addf %10, %12 : vector<128x128xf32>
    %c0_11 = arith.constant 0 : index
    %c0_12 = arith.constant 0 : index
    %14 = vector.load %arg6[%c0_11, %c0_12] : memref<128x128xf32, #tpu.memory_space<vmem>>, vector<128x128xf32>
    tpu.vector_store %arg6[%c0_11, %c0_12], %13 {strides = array<i32>} : memref<128x128xf32, #tpu.memory_space<vmem>>, vector<128x128xf32>,
    return
  }
  func.func @transform_0(%arg0: i32) -> (i32, i32) {
    %c0_i32 = arith.constant 0 : i32
    %c0_i32_0 = arith.constant 0 : i32
    return %arg0, %c0_i32 : i32, i32
  }
  func.func @transform_1(%arg0: i32) -> (i32, i32) {
    %c0_i32 = arith.constant 0 : i32
    %c0_i32_0 = arith.constant 0 : i32
    %c0_i32_1 = arith.constant 0 : i32
    return %c0_i32, %c0_i32_0 : i32, i32
  }
  func.func @transform_2(%arg0: i32) -> (i32, i32) {
    %c0_i32 = arith.constant 0 : i32
    %c0_i32_0 = arith.constant 0 : i32
    %c0_i32_1 = arith.constant 0 : i32
    return %c0_i32, %c0_i32_0 : i32, i32
  }
  func.func @transform_3(%arg0: i32) -> (i32, i32) {
    %c0_i32 = arith.constant 0 : i32
    %c0_i32_0 = arith.constant 0 : i32
    %c0_i32_1 = arith.constant 0 : i32
    return %c0_i32, %c0_i32_0 : i32, i32
  }
  func.func @transform_4(%arg0: i32) -> (i32, i32) {
    %c0_i32 = arith.constant 0 : i32
    %c0_i32_0 = arith.constant 0 : i32
    %c0_i32_1 = arith.constant 0 : i32
    return %c0_i32, %c0_i32_0 : i32, i32
  }
  func.func @transform_5(%arg0: i32) -> (i32, i32) {
    %c0_i32 = arith.constant 0 : i32
    %c0_i32_0 = arith.constant 0 : i32
    return %arg0, %c0_i32 : i32, i32
  }
}

</mosaic_0001>

<llo_original>
// kernel: tpu_custom_call.1
$region0: #{tpu_custom_call.1}
  #allocation0 [shape = 'u32[]', space=smem, size = 0x4, offset = 0x4, fixed_abs, tag = 'smem constant byte address 0x4 - core index']
  #allocation1 [shape = 'u32[72,128]{1,0:T(1,128)}', space=vmem, size = 0x9000, scoped, tag = 'internal scratch']
  %s0 = inlined_call_operand.hbm [shape: bf16[128,128], index: 0, kind: input, shape index: {}]
  %s1 = inlined_call_operand.hbm [shape: bf16[128,256], index: 1, kind: input, shape index: {}]
  %s2 = inlined_call_operand.hbm [shape: f32[1,256], index: 2, kind: input, shape index: {}]
  %s3 = inlined_call_operand.hbm [shape: bf16[256,128], index: 3, kind: input, shape index: {}]
  %s4 = inlined_call_operand.vmem [shape: f32[1,128], index: 4, kind: input, shape index: {}]
  %s5 = inlined_call_operand.hbm [shape: f32[128,128], index: 5, kind: output, shape index: {}]
  %s6 = sld [smem:[#allocation0]]
  $region46: #{tpu_custom_call.1} parent=0
    _
  %s8 = ssub.s32 1, %s6
  %s9 = scalar_select 0, %s8, %s6
  $region1: #{tpu_custom_call.1} parent=0
    #allocation2 [shape = 'u8[32768]{0}', space=vmem, size = 0x8000, scoped, tag = 'input window, operand 0, single buffered']
    #allocation3 [shape = 's32[1]{0}', space=sflag, size = 0x4, scoped, tag = 'scoped memory for tpu_custom_call.1']
    #allocation4 [shape = 's32[1]{0}', space=sflag, size = 0x4, scoped, tag = 'scoped memory for tpu_custom_call.1']
    #allocation5 [shape = 'u8[65536]{0}', space=vmem, size = 0x10000, scoped, tag = 'input window, operand 1, single buffered']
    #allocation6 [shape = 's32[1]{0}', space=sflag, size = 0x4, scoped, tag = 'scoped memory for tpu_custom_call.1']
    #allocation7 [shape = 'u8[1024]{0}', space=vmem, size = 0x400, scoped, tag = 'input window, operand 2, single buffered']
    #allocation8 [shape = 'u8[65536]{0}', space=vmem, size = 0x10000, scoped, tag = 'input window, operand 3, single buffered']
    #allocation9 [shape = 's32[1]{0}', space=sflag, size = 0x4, scoped, tag = 'scoped memory for tpu_custom_call.1']
    #allocation10 [shape = 'u8[65536]{0}', space=vmem, size = 0x10000, scoped, tag = 'output window, operand 0, single buffered']
    %10 = vsyncpa [#allocation3], 0
    %11 = vsyncpa [#allocation6], 0
    %12 = vsyncpa [#allocation9], 0
    %13 = vsyncpa [#allocation4], 0
    // Predicated region
    $region2: #{tpu_custom_call.1} parent=1 // pred_check
      _
    $region3: #{tpu_custom_call.1} parent=1 // pred_check_branch
      %15 = sbr.rel (0) target = $region5
    $region4: #{tpu_custom_call.1} parent=1 // pred_region
      %17 = vsyncadd [#allocation3], 0
      %s18 = sshll.u32 %s0, 4
      %s19 = int_to_ptr.hbm [resolvable:$true] %s18
      %s20 = sshll.u32 [#allocation2], 4
      %s21 = int_to_ptr.vmem [resolvable:$true] %s20
      %26 = dma.hbm_to_vmem [thread:$0]  %s19, 1024, %s21, [#allocation3], 64, 64, 4
    $region5: #{tpu_custom_call.1} parent=1 // pred_fallthru
      _
    // Predicated region
    $region6: #{tpu_custom_call.1} parent=1 // pred_check
      _
    $region7: #{tpu_custom_call.1} parent=1 // pred_check_branch
      %28 = sbr.rel (0) target = $region9
    $region8: #{tpu_custom_call.1} parent=1 // pred_region
      %30 = vsyncadd [#allocation6], 0
      %s31 = sshll.u32 %s1, 4
      %s32 = int_to_ptr.hbm [resolvable:$true] %s31
      %s33 = sshll.u32 [#allocation5], 4
      %s34 = int_to_ptr.vmem [resolvable:$true] %s33
      %39 = dma.hbm_to_vmem [thread:$0]  %s32, 2048, %s34, [#allocation6], 128, 128, 8
    $region9: #{tpu_custom_call.1} parent=1 // pred_fallthru
      _
    // Predicated region
    $region10: #{tpu_custom_call.1} parent=1 // pred_check
      _
    $region11: #{tpu_custom_call.1} parent=1 // pred_check_branch
      %41 = sbr.rel (0) target = $region13
    $region12: #{tpu_custom_call.1} parent=1 // pred_region
      %43 = vsyncadd [#allocation6], 0
      %s45 = sshll.u32 %s2, 4
      %s46 = int_to_ptr.hbm [resolvable:$true] %s45
      %s47 = sshll.u32 [#allocation7], 4
      %s48 = int_to_ptr.vmem [resolvable:$true] %s47
      %50 = dma.hbm_to_vmem [thread:$0]  %s46, 32, %s48, [#allocation6]
    $region13: #{tpu_custom_call.1} parent=1 // pred_fallthru
      _
    // Predicated region
    $region14: #{tpu_custom_call.1} parent=1 // pred_check
      _
    $region15: #{tpu_custom_call.1} parent=1 // pred_check_branch
      %52 = sbr.rel (0) target = $region17
    $region16: #{tpu_custom_call.1} parent=1 // pred_region
      %54 = vsyncadd [#allocation9], 0
      %s55 = sshll.u32 %s3, 4
      %s56 = int_to_ptr.hbm [resolvable:$true] %s55
      %s57 = sshll.u32 [#allocation8], 4
      %s58 = int_to_ptr.vmem [resolvable:$true] %s57
      %63 = dma.hbm_to_vmem [thread:$0]  %s56, 2048, %s58, [#allocation9], 64, 64, 4
    $region17: #{tpu_custom_call.1} parent=1 // pred_fallthru
      _
    // Predicated region
    $region18: #{tpu_custom_call.1} parent=1 // pred_check
      _
    $region19: #{tpu_custom_call.1} parent=1 // pred_check_branch
      %65 = sbr.rel (0) target = $region21
    $region20: #{tpu_custom_call.1} parent=1 // pred_region
      _
    $region21: #{tpu_custom_call.1} parent=1 // pred_fallthru
      _
    // Predicated region
    $region22: #{tpu_custom_call.1} parent=1 // pred_check
      _
    $region23: #{tpu_custom_call.1} parent=1 // pred_check_branch
      %67 = sbr.rel (0) target = $region25
    $region24: #{tpu_custom_call.1} parent=1 // pred_region
      %69 = dma.done [#allocation3], 1024
    $region25: #{tpu_custom_call.1} parent=1 // pred_fallthru
      _
    // Predicated region
    $region26: #{tpu_custom_call.1} parent=1 // pred_check
      _
    $region27: #{tpu_custom_call.1} parent=1 // pred_check_branch
      %71 = sbr.rel (0) target = $region29
    $region28: #{tpu_custom_call.1} parent=1 // pred_region
      %73 = dma.done [#allocation6], 2048
    $region29: #{tpu_custom_call.1} parent=1 // pred_fallthru
      _
    // Predicated region
    $region30: #{tpu_custom_call.1} parent=1 // pred_check
      _
    $region31: #{tpu_custom_call.1} parent=1 // pred_check_branch
      %75 = sbr.rel (0) target = $region33
    $region32: #{tpu_custom_call.1} parent=1 // pred_region
      %77 = dma.done [#allocation6], 32
    $region33: #{tpu_custom_call.1} parent=1 // pred_fallthru
      _
    // Predicated region
    $region34: #{tpu_custom_call.1} parent=1 // pred_check
      _
    $region35: #{tpu_custom_call.1} parent=1 // pred_check_branch
      %79 = sbr.rel (0) target = $region37
    $region36: #{tpu_custom_call.1} parent=1 // pred_region
      %81 = dma.done [#allocation9], 2048
    $region37: #{tpu_custom_call.1} parent=1 // pred_fallthru
      _
    %v82 = vld [vmem:[#allocation2] sm:$0xf]
    %v83 = vld [vmem:[#allocation2 + $0x4] sm:$0xf]
    %v84 = vld [vmem:[#allocation2 + $0x8] sm:$0xf]
    %v85 = vld [vmem:[#allocation2 + $0xc] sm:$0xf]
    %v86 = vld [vmem:[#allocation2 + $0x10] sm:$0xf]
    %v87 = vld [vmem:[#allocation2 + $0x14] sm:$0xf]
    %v88 = vld [vmem:[#allocation2 + $0x18] sm:$0xf]
    %v89 = vld [vmem:[#allocation2 + $0x1c] sm:$0xf]
    %v90 = vld [vmem:[#allocation2 + $0x20] sm:$0xf]
    %v91 = vld [vmem:[#allocation2 + $0x24] sm:$0xf]
    %v92 = vld [vmem:[#allocation2 + $0x28] sm:$0xf]
    %v93 = vld [vmem:[#allocation2 + $0x2c] sm:$0xf]
    %v94 = vld [vmem:[#allocation2 + $0x30] sm:$0xf]
    %v95 = vld [vmem:[#allocation2 + $0x34] sm:$0xf]
    %v96 = vld [vmem:[#allocation2 + $0x38] sm:$0xf]
    %v97 = vld [vmem:[#allocation2 + $0x3c] sm:$0xf]
    %v98 = vld [vmem:[#allocation5] sm:$0xff]
    %v99 = vld [vmem:[#allocation5 + $0x8] sm:$0xff]
    %v100 = vld [vmem:[#allocation5 + $0x10] sm:$0xff]
    %v101 = vld [vmem:[#allocation5 + $0x18] sm:$0xff]
    %v102 = vld [vmem:[#allocation5 + $0x20] sm:$0xff]
    %v103 = vld [vmem:[#allocation5 + $0x28] sm:$0xff]
    %v104 = vld [vmem:[#allocation5 + $0x30] sm:$0xff]
    %v105 = vld [vmem:[#allocation5 + $0x38] sm:$0xff]
    %v106 = vld [vmem:[#allocation5 + $0x40] sm:$0xff]
    %v107 = vld [vmem:[#allocation5 + $0x48] sm:$0xff]
    %v108 = vld [vmem:[#allocation5 + $0x50] sm:$0xff]
    %v109 = vld [vmem:[#allocation5 + $0x58] sm:$0xff]
    %v110 = vld [vmem:[#allocation5 + $0x60] sm:$0xff]
    %v111 = vld [vmem:[#allocation5 + $0x68] sm:$0xff]
    %v112 = vld [vmem:[#allocation5 + $0x70] sm:$0xff]
    %v113 = vld [vmem:[#allocation5 + $0x78] sm:$0xff]
    %v114 = vld [vmem:[#allocation7] sm:$0x3]
    %v116 = vperm.slane %v114, 0
    %v117 = vperm.slane %v114, 1
    %v136 = vunpack.c.l.b16 %v82
    %v137 = vunpack.c.l.b16 %v83
    %v138 = vunpack.c.l.b16 %v84
    %v139 = vunpack.c.l.b16 %v85
    %v140 = vunpack.c.l.b16 %v86
    %v141 = vunpack.c.l.b16 %v87
    %v142 = vunpack.c.l.b16 %v88
    %v143 = vunpack.c.l.b16 %v89
    %v144 = vunpack.c.l.b16 %v90
    %v145 = vunpack.c.l.b16 %v91
    %v146 = vunpack.c.l.b16 %v92
    %v147 = vunpack.c.l.b16 %v93
    %v148 = vunpack.c.l.b16 %v94
    %v149 = vunpack.c.l.b16 %v95
    %v150 = vunpack.c.l.b16 %v96
    %v151 = vunpack.c.l.b16 %v97
    %v152 = vpack.c.b16 %v137, %v136
    %v153 = vpack.c.b16 %v139, %v138
    %v154 = vpack.c.b16 %v141, %v140
    %v155 = vpack.c.b16 %v143, %v142
    %v156 = vpack.c.b16 %v145, %v144
    %v157 = vpack.c.b16 %v147, %v146
    %v158 = vpack.c.b16 %v149, %v148
    %v159 = vpack.c.b16 %v151, %v150
    %v184 = vunpack.c.l.b16 %v98
    %v185 = vunpack.c.h.b16 %v98
    %v186 = vunpack.c.l.b16 %v99
    %v187 = vunpack.c.h.b16 %v99
    %v188 = vunpack.c.l.b16 %v100
    %v189 = vunpack.c.h.b16 %v100
    %v190 = vunpack.c.l.b16 %v101
    %v191 = vunpack.c.h.b16 %v101
    %v192 = vunpack.c.l.b16 %v102
    %v193 = vunpack.c.h.b16 %v102
    %v194 = vunpack.c.l.b16 %v103
    %v195 = vunpack.c.h.b16 %v103
    %v196 = vunpack.c.l.b16 %v104
    %v197 = vunpack.c.h.b16 %v104
    %v198 = vunpack.c.l.b16 %v105
    %v199 = vunpack.c.h.b16 %v105
    %v200 = vunpack.c.l.b16 %v106
    %v201 = vunpack.c.h.b16 %v106
    %v202 = vunpack.c.l.b16 %v107
    %v203 = vunpack.c.h.b16 %v107
    %v204 = vunpack.c.l.b16 %v108
    %v205 = vunpack.c.h.b16 %v108
    %v206 = vunpack.c.l.b16 %v109
    %v207 = vunpack.c.h.b16 %v109
    %v208 = vunpack.c.l.b16 %v110
    %v209 = vunpack.c.h.b16 %v110
    %v210 = vunpack.c.l.b16 %v111
    %v211 = vunpack.c.h.b16 %v111
    %v212 = vunpack.c.l.b16 %v112
    %v213 = vunpack.c.h.b16 %v112
    %v214 = vunpack.c.l.b16 %v113
    %v215 = vunpack.c.h.b16 %v113
    %v216 = vpack.c.b16 %v186, %v184
    %v217 = vpack.c.b16 %v187, %v185
    %v218 = vpack.c.b16 %v190, %v188
    %v219 = vpack.c.b16 %v191, %v189
    %v220 = vpack.c.b16 %v194, %v192
    %v221 = vpack.c.b16 %v195, %v193
    %v222 = vpack.c.b16 %v198, %v196
    %v223 = vpack.c.b16 %v199, %v197
    %v224 = vpack.c.b16 %v202, %v200
    %v225 = vpack.c.b16 %v203, %v201
    %v226 = vpack.c.b16 %v206, %v204
    %v227 = vpack.c.b16 %v207, %v205
    %v228 = vpack.c.b16 %v210, %v208
    %v229 = vpack.c.b16 %v211, %v209
    %v230 = vpack.c.b16 %v214, %v212
    %v231 = vpack.c.b16 %v215, %v213
    %248 = vmatpush.bf16.msra.mxu0 %v230
    %249 = vmatpush.bf16.msra.mxu0 %v228
    %250 = vmatpush.bf16.msra.mxu0 %v226
    %251 = vmatpush.bf16.msra.mxu0 %v224
    %252 = vmatpush.bf16.msra.mxu0 %v222
    %253 = vmatpush.bf16.msra.mxu0 %v220
    %254 = vmatpush.bf16.msra.mxu0 %v218
    %255 = vmatpush.bf16.msra.mxu0 %v216
    %256 = vmatmul.bf16.gmra.mxu0 %v152
    %v257 = vpop.f32.mrf.mxu0
    %v258 = vadd.f32 %v116, %v257
    %v259 = vpop.f32.mrf.mxu0
    %v260 = vadd.f32 %v116, %v259
    %261 = vmatmul.bf16.gmra.mxu0 %v153
    %v262 = vpop.f32.mrf.mxu0
    %v263 = vadd.f32 %v116, %v262
    %v264 = vpop.f32.mrf.mxu0
    %v265 = vadd.f32 %v116, %v264
    %266 = vmatmul.bf16.gmra.mxu0 %v154
    %v267 = vpop.f32.mrf.mxu0
    %v268 = vadd.f32 %v116, %v267
    %v269 = vpop.f32.mrf.mxu0
    %v270 = vadd.f32 %v116, %v269
    %271 = vmatmul.bf16.gmra.mxu0 %v155
    %v272 = vpop.f32.mrf.mxu0
    %v273 = vadd.f32 %v116, %v272
    %v274 = vpop.f32.mrf.mxu0
    %v275 = vadd.f32 %v116, %v274
    %276 = vmatmul.bf16.gmra.mxu0 %v156
    %v277 = vpop.f32.mrf.mxu0
    %v278 = vadd.f32 %v116, %v277
    %v279 = vpop.f32.mrf.mxu0
    %v280 = vadd.f32 %v116, %v279
    %281 = vmatmul.bf16.gmra.mxu0 %v157
    %v282 = vpop.f32.mrf.mxu0
    %v283 = vadd.f32 %v116, %v282
    %v284 = vpop.f32.mrf.mxu0
    %v285 = vadd.f32 %v116, %v284
    %286 = vmatmul.bf16.gmra.mxu0 %v158
    %v287 = vpop.f32.mrf.mxu0
    %v288 = vadd.f32 %v116, %v287
    %v289 = vpop.f32.mrf.mxu0
    %v290 = vadd.f32 %v116, %v289
    %291 = vmatmul.bf16.gmra.mxu0 %v159
    %v292 = vpop.f32.mrf.mxu0
    %v293 = vadd.f32 %v116, %v292
    %v294 = vpop.f32.mrf.mxu0
    %v295 = vadd.f32 %v116, %v294
    %296 = vdwg.mxu0
    %297 = vmatpush.bf16.msra.mxu0 %v231
    %298 = vmatpush.bf16.msra.mxu0 %v229
    %299 = vmatpush.bf16.msra.mxu0 %v227
    %300 = vmatpush.bf16.msra.mxu0 %v225
    %301 = vmatpush.bf16.msra.mxu0 %v223
    %302 = vmatpush.bf16.msra.mxu0 %v221
    %303 = vmatpush.bf16.msra.mxu0 %v219
    %304 = vmatpush.bf16.msra.mxu0 %v217
    %305 = vmatmul.bf16.gmra.mxu0 %v152
    %v306 = vpop.f32.mrf.mxu0
    %v307 = vadd.f32 %v117, %v306
    %v308 = vpop.f32.mrf.mxu0
    %v309 = vadd.f32 %v117, %v308
    %310 = vmatmul.bf16.gmra.mxu0 %v153
    %v311 = vpop.f32.mrf.mxu0
    %v312 = vadd.f32 %v117, %v311
    %v313 = vpop.f32.mrf.mxu0
    %v314 = vadd.f32 %v117, %v313
    %315 = vmatmul.bf16.gmra.mxu0 %v154
    %v316 = vpop.f32.mrf.mxu0
    %v317 = vadd.f32 %v117, %v316
    %v318 = vpop.f32.mrf.mxu0
    %v319 = vadd.f32 %v117, %v318
    %320 = vmatmul.bf16.gmra.mxu0 %v155
    %v321 = vpop.f32.mrf.mxu0
    %v322 = vadd.f32 %v117, %v321
    %v323 = vpop.f32.mrf.mxu0
    %v324 = vadd.f32 %v117, %v323
    %325 = vmatmul.bf16.gmra.mxu0 %v156
    %v326 = vpop.f32.mrf.mxu0
    %v327 = vadd.f32 %v117, %v326
    %v328 = vpop.f32.mrf.mxu0
    %v329 = vadd.f32 %v117, %v328
    %330 = vmatmul.bf16.gmra.mxu0 %v157
    %v331 = vpop.f32.mrf.mxu0
    %v332 = vadd.f32 %v117, %v331
    %v333 = vpop.f32.mrf.mxu0
    %v334 = vadd.f32 %v117, %v333
    %335 = vmatmul.bf16.gmra.mxu0 %v158
    %v336 = vpop.f32.mrf.mxu0
    %v337 = vadd.f32 %v117, %v336
    %v338 = vpop.f32.mrf.mxu0
    %v339 = vadd.f32 %v117, %v338
    %340 = vmatmul.bf16.gmra.mxu0 %v159
    %v341 = vpop.f32.mrf.mxu0
    %v342 = vadd.f32 %v117, %v341
    %v343 = vpop.f32.mrf.mxu0
    %v344 = vadd.f32 %v117, %v343
    %345 = vdwg.mxu0
    %v346 = vmax.f32 %v258, 0.0
    %v347 = vmax.f32 %v307, 0.0
    %v348 = vmax.f32 %v260, 0.0
    %v349 = vmax.f32 %v309, 0.0
    %v350 = vmax.f32 %v263, 0.0
    %v351 = vmax.f32 %v312, 0.0
    %v352 = vmax.f32 %v265, 0.0
    %v353 = vmax.f32 %v314, 0.0
    %v354 = vmax.f32 %v268, 0.0
    %v355 = vmax.f32 %v317, 0.0
    %v356 = vmax.f32 %v270, 0.0
    %v357 = vmax.f32 %v319, 0.0
    %v358 = vmax.f32 %v273, 0.0
    %v359 = vmax.f32 %v322, 0.0
    %v360 = vmax.f32 %v275, 0.0
    %v361 = vmax.f32 %v324, 0.0
    %v362 = vmax.f32 %v278, 0.0
    %v363 = vmax.f32 %v327, 0.0
    %v364 = vmax.f32 %v280, 0.0
    %v365 = vmax.f32 %v329, 0.0
    %v366 = vmax.f32 %v283, 0.0
    %v367 = vmax.f32 %v332, 0.0
    %v368 = vmax.f32 %v285, 0.0
    %v369 = vmax.f32 %v334, 0.0
    %v370 = vmax.f32 %v288, 0.0
    %v371 = vmax.f32 %v337, 0.0
    %v372 = vmax.f32 %v290, 0.0
    %v373 = vmax.f32 %v339, 0.0
    %v374 = vmax.f32 %v293, 0.0
    %v375 = vmax.f32 %v342, 0.0
    %v376 = vmax.f32 %v295, 0.0
    %v377 = vmax.f32 %v344, 0.0
    %v378 = vpack.c.bf16 %v348, %v346
    %v379 = vpack.c.bf16 %v349, %v347
    %v380 = vpack.c.bf16 %v352, %v350
    %v381 = vpack.c.bf16 %v353, %v351
    %v382 = vpack.c.bf16 %v356, %v354
    %v383 = vpack.c.bf16 %v357, %v355
    %v384 = vpack.c.bf16 %v360, %v358
    %v385 = vpack.c.bf16 %v361, %v359
    %v386 = vpack.c.bf16 %v364, %v362
    %v387 = vpack.c.bf16 %v365, %v363
    %v388 = vpack.c.bf16 %v368, %v366
    %v389 = vpack.c.bf16 %v369, %v367
    %v390 = vpack.c.bf16 %v372, %v370
    %v391 = vpack.c.bf16 %v373, %v371
    %v392 = vpack.c.bf16 %v376, %v374
    %v393 = vpack.c.bf16 %v377, %v375
    %v394 = vld [vmem:[#allocation8] sm:$0xf]
    %v395 = vld [vmem:[#allocation8 + $0x4] sm:$0xf]
    %v396 = vld [vmem:[#allocation8 + $0x8] sm:$0xf]
    %v397 = vld [vmem:[#allocation8 + $0xc] sm:$0xf]
    %v398 = vld [vmem:[#allocation8 + $0x10] sm:$0xf]
    %v399 = vld [vmem:[#allocation8 + $0x14] sm:$0xf]
    %v400 = vld [vmem:[#allocation8 + $0x18] sm:$0xf]
    %v401 = vld [vmem:[#allocation8 + $0x1c] sm:$0xf]
    %v402 = vld [vmem:[#allocation8 + $0x20] sm:$0xf]
    %v403 = vld [vmem:[#allocation8 + $0x24] sm:$0xf]
    %v404 = vld [vmem:[#allocation8 + $0x28] sm:$0xf]
    %v405 = vld [vmem:[#allocation8 + $0x2c] sm:$0xf]
    %v406 = vld [vmem:[#allocation8 + $0x30] sm:$0xf]
    %v407 = vld [vmem:[#allocation8 + $0x34] sm:$0xf]
    %v408 = vld [vmem:[#allocation8 + $0x38] sm:$0xf]
    %v409 = vld [vmem:[#allocation8 + $0x3c] sm:$0xf]
    %v410 = vld [vmem:[#allocation8 + $0x40] sm:$0xf]
    %v411 = vld [vmem:[#allocation8 + $0x44] sm:$0xf]
    %v412 = vld [vmem:[#allocation8 + $0x48] sm:$0xf]
    %v413 = vld [vmem:[#allocation8 + $0x4c] sm:$0xf]
    %v414 = vld [vmem:[#allocation8 + $0x50] sm:$0xf]
    %v415 = vld [vmem:[#allocation8 + $0x54] sm:$0xf]
    %v416 = vld [vmem:[#allocation8 + $0x58] sm:$0xf]
    %v417 = vld [vmem:[#allocation8 + $0x5c] sm:$0xf]
    %v418 = vld [vmem:[#allocation8 + $0x60] sm:$0xf]
    %v419 = vld [vmem:[#allocation8 + $0x64] sm:$0xf]
    %v420 = vld [vmem:[#allocation8 + $0x68] sm:$0xf]
    %v421 = vld [vmem:[#allocation8 + $0x6c] sm:$0xf]
    %v422 = vld [vmem:[#allocation8 + $0x70] sm:$0xf]
    %v423 = vld [vmem:[#allocation8 + $0x74] sm:$0xf]
    %v424 = vld [vmem:[#allocation8 + $0x78] sm:$0xf]
    %v425 = vld [vmem:[#allocation8 + $0x7c] sm:$0xf]
    %v426 = vld [vmem:[%s4] sm:$0x1]
    %v428 = vperm.slane %v426, 0
    %v462 = vunpack.c.l.b16 %v394
    %v463 = vunpack.c.l.b16 %v395
    %v464 = vunpack.c.l.b16 %v396
    %v465 = vunpack.c.l.b16 %v397
    %v466 = vunpack.c.l.b16 %v398
    %v467 = vunpack.c.l.b16 %v399
    %v468 = vunpack.c.l.b16 %v400
    %v469 = vunpack.c.l.b16 %v401
    %v470 = vunpack.c.l.b16 %v402
    %v471 = vunpack.c.l.b16 %v403
    %v472 = vunpack.c.l.b16 %v404
    %v473 = vunpack.c.l.b16 %v405
    %v474 = vunpack.c.l.b16 %v406
    %v475 = vunpack.c.l.b16 %v407
    %v476 = vunpack.c.l.b16 %v408
    %v477 = vunpack.c.l.b16 %v409
    %v478 = vunpack.c.l.b16 %v410
    %v479 = vunpack.c.l.b16 %v411
    %v480 = vunpack.c.l.b16 %v412
    %v481 = vunpack.c.l.b16 %v413
    %v482 = vunpack.c.l.b16 %v414
    %v483 = vunpack.c.l.b16 %v415
    %v484 = vunpack.c.l.b16 %v416
    %v485 = vunpack.c.l.b16 %v417
    %v486 = vunpack.c.l.b16 %v418
    %v487 = vunpack.c.l.b16 %v419
    %v488 = vunpack.c.l.b16 %v420
    %v489 = vunpack.c.l.b16 %v421
    %v490 = vunpack.c.l.b16 %v422
    %v491 = vunpack.c.l.b16 %v423
    %v492 = vunpack.c.l.b16 %v424
    %v493 = vunpack.c.l.b16 %v425
    %v494 = vpack.c.b16 %v463, %v462
    %v495 = vpack.c.b16 %v465, %v464
    %v496 = vpack.c.b16 %v467, %v466
    %v497 = vpack.c.b16 %v469, %v468
    %v498 = vpack.c.b16 %v471, %v470
    %v499 = vpack.c.b16 %v473, %v472
    %v500 = vpack.c.b16 %v475, %v474
    %v501 = vpack.c.b16 %v477, %v476
    %v502 = vpack.c.b16 %v479, %v478
    %v503 = vpack.c.b16 %v481, %v480
    %v504 = vpack.c.b16 %v483, %v482
    %v505 = vpack.c.b16 %v485, %v484
    %v506 = vpack.c.b16 %v487, %v486
    %v507 = vpack.c.b16 %v489, %v488
    %v508 = vpack.c.b16 %v491, %v490
    %v509 = vpack.c.b16 %v493, %v492
    %526 = vmatpush.bf16.msra.mxu0 %v501
    %527 = vmatpush.bf16.msra.mxu0 %v500
    %528 = vmatpush.bf16.msra.mxu0 %v499
    %529 = vmatpush.bf16.msra.mxu0 %v498
    %530 = vmatpush.bf16.msra.mxu0 %v497
    %531 = vmatpush.bf16.msra.mxu0 %v496
    %532 = vmatpush.bf16.msra.mxu0 %v495
    %533 = vmatpush.bf16.msra.mxu0 %v494
    %534 = vmatmul.bf16.gmra.mxu0 %v378
    %v535 = vpop.f32.mrf.mxu0
    %v536 = vadd.f32 %v428, %v535
    %v537 = vpop.f32.mrf.mxu0
    %v538 = vadd.f32 %v428, %v537
    %539 = vmatmul.bf16.gmra.mxu0 %v380
    %v540 = vpop.f32.mrf.mxu0
    %v541 = vadd.f32 %v428, %v540
    %v542 = vpop.f32.mrf.mxu0
    %v543 = vadd.f32 %v428, %v542
    %544 = vmatmul.bf16.gmra.mxu0 %v382
    %v545 = vpop.f32.mrf.mxu0
    %v546 = vadd.f32 %v428, %v545
    %v547 = vpop.f32.mrf.mxu0
    %v548 = vadd.f32 %v428, %v547
    %549 = vmatmul.bf16.gmra.mxu0 %v384
    %v550 = vpop.f32.mrf.mxu0
    %v551 = vadd.f32 %v428, %v550
    %v552 = vpop.f32.mrf.mxu0
    %v553 = vadd.f32 %v428, %v552
    %554 = vmatmul.bf16.gmra.mxu0 %v386
    %v555 = vpop.f32.mrf.mxu0
    %v556 = vadd.f32 %v428, %v555
    %v557 = vpop.f32.mrf.mxu0
    %v558 = vadd.f32 %v428, %v557
    %559 = vmatmul.bf16.gmra.mxu0 %v388
    %v560 = vpop.f32.mrf.mxu0
    %v561 = vadd.f32 %v428, %v560
    %v562 = vpop.f32.mrf.mxu0
    %v563 = vadd.f32 %v428, %v562
    %564 = vmatmul.bf16.gmra.mxu0 %v390
    %v565 = vpop.f32.mrf.mxu0
    %v566 = vadd.f32 %v428, %v565
    %v567 = vpop.f32.mrf.mxu0
    %v568 = vadd.f32 %v428, %v567
    %569 = vmatmul.bf16.gmra.mxu0 %v392
    %v570 = vpop.f32.mrf.mxu0
    %v571 = vadd.f32 %v428, %v570
    %v572 = vpop.f32.mrf.mxu0
    %v573 = vadd.f32 %v428, %v572
    %574 = vdwg.mxu0
    %575 = vmatpush.bf16.msra.mxu0 %v509
    %576 = vmatpush.bf16.msra.mxu0 %v508
    %577 = vmatpush.bf16.msra.mxu0 %v507
    %578 = vmatpush.bf16.msra.mxu0 %v506
    %579 = vmatpush.bf16.msra.mxu0 %v505
    %580 = vmatpush.bf16.msra.mxu0 %v504
    %581 = vmatpush.bf16.msra.mxu0 %v503
    %582 = vmatpush.bf16.msra.mxu0 %v502
    %583 = vmatmul.bf16.gmra.mxu0 %v379
    %v584 = vpop.f32.mrf.mxu0
    %v585 = vadd.f32 %v536, %v584
    %v586 = vpop.f32.mrf.mxu0
    %v587 = vadd.f32 %v538, %v586
    %588 = vmatmul.bf16.gmra.mxu0 %v381
    %v589 = vpop.f32.mrf.mxu0
    %v590 = vadd.f32 %v541, %v589
    %v591 = vpop.f32.mrf.mxu0
    %v592 = vadd.f32 %v543, %v591
    %593 = vmatmul.bf16.gmra.mxu0 %v383
    %v594 = vpop.f32.mrf.mxu0
    %v595 = vadd.f32 %v546, %v594
    %v596 = vpop.f32.mrf.mxu0
    %v597 = vadd.f32 %v548, %v596
    %598 = vmatmul.bf16.gmra.mxu0 %v385
    %v599 = vpop.f32.mrf.mxu0
    %v600 = vadd.f32 %v551, %v599
    %v601 = vpop.f32.mrf.mxu0
    %v602 = vadd.f32 %v553, %v601
    %603 = vmatmul.bf16.gmra.mxu0 %v387
    %v604 = vpop.f32.mrf.mxu0
    %v605 = vadd.f32 %v556, %v604
    %v606 = vpop.f32.mrf.mxu0
    %v607 = vadd.f32 %v558, %v606
    %608 = vmatmul.bf16.gmra.mxu0 %v389
    %v609 = vpop.f32.mrf.mxu0
    %v610 = vadd.f32 %v561, %v609
    %v611 = vpop.f32.mrf.mxu0
    %v612 = vadd.f32 %v563, %v611
    %613 = vmatmul.bf16.gmra.mxu0 %v391
    %v614 = vpop.f32.mrf.mxu0
    %v615 = vadd.f32 %v566, %v614
    %v616 = vpop.f32.mrf.mxu0
    %v617 = vadd.f32 %v568, %v616
    %618 = vmatmul.bf16.gmra.mxu0 %v393
    %v619 = vpop.f32.mrf.mxu0
    %v620 = vadd.f32 %v571, %v619
    %v621 = vpop.f32.mrf.mxu0
    %v622 = vadd.f32 %v573, %v621
    %623 = vdwg.mxu0
    %624 = vst [vmem:[#allocation10] sm:$0xff] %v585
    %625 = vst [vmem:[#allocation10 + $0x8] sm:$0xff] %v587
    %626 = vst [vmem:[#allocation10 + $0x10] sm:$0xff] %v590
    %627 = vst [vmem:[#allocation10 + $0x18] sm:$0xff] %v592
    %628 = vst [vmem:[#allocation10 + $0x20] sm:$0xff] %v595
    %629 = vst [vmem:[#allocation10 + $0x28] sm:$0xff] %v597
    %630 = vst [vmem:[#allocation10 + $0x30] sm:$0xff] %v600
    %631 = vst [vmem:[#allocation10 + $0x38] sm:$0xff] %v602
    %632 = vst [vmem:[#allocation10 + $0x40] sm:$0xff] %v605
    %633 = vst [vmem:[#allocation10 + $0x48] sm:$0xff] %v607
    %634 = vst [vmem:[#allocation10 + $0x50] sm:$0xff] %v610
    %635 = vst [vmem:[#allocation10 + $0x58] sm:$0xff] %v612
    %636 = vst [vmem:[#allocation10 + $0x60] sm:$0xff] %v615
    %637 = vst [vmem:[#allocation10 + $0x68] sm:$0xff] %v617
    %638 = vst [vmem:[#allocation10 + $0x70] sm:$0xff] %v620
    %639 = vst [vmem:[#allocation10 + $0x78] sm:$0xff] %v622
    // Predicated region
    $region38: #{tpu_custom_call.1} parent=1 // pred_check
      _
    $region39: #{tpu_custom_call.1} parent=1 // pred_check_branch
      %641 = sbr.rel (0) target = $region41
    $region40: #{tpu_custom_call.1} parent=1 // pred_region
      %643 = vsyncadd [#allocation4], 0
      %s644 = sshll.u32 [#allocation10], 4
      %s645 = int_to_ptr.vmem [resolvable:$true] %s644
      %s646 = sshll.u32 %s5, 4
      %s647 = int_to_ptr.hbm [resolvable:$true] %s646
      %652 = dma.vmem_to_hbm [thread:$0]  %s645, 2048, %s647, [#allocation4], 128, 128, 8
    $region41: #{tpu_custom_call.1} parent=1 // pred_fallthru
      _
    // Predicated region
    $region42: #{tpu_custom_call.1} parent=1 // pred_check
      _
    $region43: #{tpu_custom_call.1} parent=1 // pred_check_branch
      %654 = sbr.rel (0) target = $region45
    $region44: #{tpu_custom_call.1} parent=1 // pred_region
      %656 = dma.done [#allocation4], 2048
    $region45: #{tpu_custom_call.1} parent=1 // pred_fallthru
      _
    %657 = vsyncpa [#allocation3], 1
    %658 = vsyncpa [#allocation6], 1
    %659 = vsyncpa [#allocation9], 1
    %660 = vsyncpa [#allocation4], 1

// kernel: tpu_custom_call.1
$region0: #{tpu_custom_call.1}
  #allocation0 [shape = 'u32[]', space=smem, size = 0x4, offset = 0x4, fixed_abs, tag = 'smem constant byte address 0x4 - core index']
  #allocation1 [shape = 'u32[72,128]{1,0:T(1,128)}', space=vmem, size = 0x9000, scoped, tag = 'internal scratch']
  %s0 = inlined_call_operand.hbm [shape: bf16[128,128], index: 0, kind: input, shape index: {}]
  %s1 = inlined_call_operand.hbm [shape: bf16[128,256], index: 1, kind: input, shape index: {}]
  %s2 = inlined_call_operand.hbm [shape: f32[1,256], index: 2, kind: input, shape index: {}]
  %s3 = inlined_call_operand.hbm [shape: bf16[256,128], index: 3, kind: input, shape index: {}]
  %s4 = inlined_call_operand.vmem [shape: f32[1,128], index: 4, kind: input, shape index: {}]
  %s5 = inlined_call_operand.hbm [shape: f32[128,128], index: 5, kind: output, shape index: {}]
  %s6 = sld [smem:[#allocation0]]
  $region46: #{tpu_custom_call.1} parent=0
    _
  %s8 = ssub.s32 1, %s6
  %s9 = scalar_select 0, %s8, %s6
  $region1: #{tpu_custom_call.1} parent=0
    #allocation2 [shape = 'u8[32768]{0}', space=vmem, size = 0x8000, scoped, tag = 'input window, operand 0, single buffered']
    #allocation3 [shape = 's32[1]{0}', space=sflag, size = 0x4, scoped, tag = 'scoped memory for tpu_custom_call.1']
    #allocation4 [shape = 's32[1]{0}', space=sflag, size = 0x4, scoped, tag = 'scoped memory for tpu_custom_call.1']
    #allocation5 [shape = 'u8[65536]{0}', space=vmem, size = 0x10000, scoped, tag = 'input window, operand 1, single buffered']
    #allocation6 [shape = 's32[1]{0}', space=sflag, size = 0x4, scoped, tag = 'scoped memory for tpu_custom_call.1']
    #allocation7 [shape = 'u8[1024]{0}', space=vmem, size = 0x400, scoped, tag = 'input window, operand 2, single buffered']
    #allocation8 [shape = 'u8[65536]{0}', space=vmem, size = 0x10000, scoped, tag = 'input window, operand 3, single buffered']
    #allocation9 [shape = 's32[1]{0}', space=sflag, size = 0x4, scoped, tag = 'scoped memory for tpu_custom_call.1']
    #allocation10 [shape = 'u8[65536]{0}', space=vmem, size = 0x10000, scoped, tag = 'output window, operand 0, single buffered']
    %10 = vsyncpa [#allocation3], 0
    %11 = vsyncpa [#allocation6], 0
    %12 = vsyncpa [#allocation9], 0
    %13 = vsyncpa [#allocation4], 0
    // Predicated region
    $region2: #{tpu_custom_call.1} parent=1 // pred_check
      _
    $region3: #{tpu_custom_call.1} parent=1 // pred_check_branch
      %15 = sbr.rel (0) target = $region5
    $region4: #{tpu_custom_call.1} parent=1 // pred_region
      %17 = vsyncadd [#allocation3], 0
      %s18 = sshll.u32 %s0, 4
      %s19 = int_to_ptr.hbm [resolvable:$true] %s18
      %s20 = sshll.u32 [#allocation2], 4
      %s21 = int_to_ptr.vmem [resolvable:$true] %s20
      %26 = dma.hbm_to_vmem [thread:$0]  %s19, 1024, %s21, [#allocation3], 64, 64, 4
    $region5: #{tpu_custom_call.1} parent=1 // pred_fallthru
      _
    // Predicated region
    $region6: #{tpu_custom_call.1} parent=1 // pred_check
      _
    $region7: #{tpu_custom_call.1} parent=1 // pred_check_branch
      %28 = sbr.rel (0) target = $region9
    $region8: #{tpu_custom_call.1} parent=1 // pred_region
      %30 = vsyncadd [#allocation6], 0
      %s31 = sshll.u32 %s1, 4
      %s32 = int_to_ptr.hbm [resolvable:$true] %s31
      %s33 = sshll.u32 [#allocation5], 4
      %s34 = int_to_ptr.vmem [resolvable:$true] %s33
      %39 = dma.hbm_to_vmem [thread:$0]  %s32, 2048, %s34, [#allocation6], 128, 128, 8
    $region9: #{tpu_custom_call.1} parent=1 // pred_fallthru
      _
    // Predicated region
    $region10: #{tpu_custom_call.1} parent=1 // pred_check
      _
    $region11: #{tpu_custom_call.1} parent=1 // pred_check_branch
      %41 = sbr.rel (0) target = $region13
    $region12: #{tpu_custom_call.1} parent=1 // pred_region
      %43 = vsyncadd [#allocation6], 0
      %s45 = sshll.u32 %s2, 4
      %s46 = int_to_ptr.hbm [resolvable:$true] %s45
      %s47 = sshll.u32 [#allocation7], 4
      %s48 = int_to_ptr.vmem [resolvable:$true] %s47
      %50 = dma.hbm_to_vmem [thread:$0]  %s46, 32, %s48, [#allocation6]
    $region13: #{tpu_custom_call.1} parent=1 // pred_fallthru
      _
    // Predicated region
    $region14: #{tpu_custom_call.1} parent=1 // pred_check
      _
    $region15: #{tpu_custom_call.1} parent=1 // pred_check_branch
      %52 = sbr.rel (0) target = $region17
    $region16: #{tpu_custom_call.1} parent=1 // pred_region
      %54 = vsyncadd [#allocation9], 0
      %s55 = sshll.u32 %s3, 4
      %s56 = int_to_ptr.hbm [resolvable:$true] %s55
      %s57 = sshll.u32 [#allocation8], 4
      %s58 = int_to_ptr.vmem [resolvable:$true] %s57
      %63 = dma.hbm_to_vmem [thread:$0]  %s56, 2048, %s58, [#allocation9], 64, 64, 4
    $region17: #{tpu_custom_call.1} parent=1 // pred_fallthru
      _
    // Predicated region
    $region18: #{tpu_custom_call.1} parent=1 // pred_check
      _
    $region19: #{tpu_custom_call.1} parent=1 // pred_check_branch
      %65 = sbr.rel (0) target = $region21
    $region20: #{tpu_custom_call.1} parent=1 // pred_region
      _
    $region21: #{tpu_custom_call.1} parent=1 // pred_fallthru
      _
    // Predicated region
    $region22: #{tpu_custom_call.1} parent=1 // pred_check
      _
    $region23: #{tpu_custom_call.1} parent=1 // pred_check_branch
      %67 = sbr.rel (0) target = $region25
    $region24: #{tpu_custom_call.1} parent=1 // pred_region
      %69 = dma.done [#allocation3], 1024
    $region25: #{tpu_custom_call.1} parent=1 // pred_fallthru
      _
    // Predicated region
    $region26: #{tpu_custom_call.1} parent=1 // pred_check
      _
    $region27: #{tpu_custom_call.1} parent=1 // pred_check_branch
      %71 = sbr.rel (0) target = $region29
    $region28: #{tpu_custom_call.1} parent=1 // pred_region
      %73 = dma.done [#allocation6], 2048
    $region29: #{tpu_custom_call.1} parent=1 // pred_fallthru
      _
    // Predicated region
    $region30: #{tpu_custom_call.1} parent=1 // pred_check
      _
    $region31: #{tpu_custom_call.1} parent=1 // pred_check_branch
      %75 = sbr.rel (0) target = $region33
    $region32: #{tpu_custom_call.1} parent=1 // pred_region
      %77 = dma.done [#allocation6], 32
    $region33: #{tpu_custom_call.1} parent=1 // pred_fallthru
      _
    // Predicated region
    $region34: #{tpu_custom_call.1} parent=1 // pred_check
      _
    $region35: #{tpu_custom_call.1} parent=1 // pred_check_branch
      %79 = sbr.rel (0) target = $region37
    $region36: #{tpu_custom_call.1} parent=1 // pred_region
      %81 = dma.done [#allocation9], 2048
    $region37: #{tpu_custom_call.1} parent=1 // pred_fallthru
      _
    %v82 = vld [vmem:[#allocation2] sm:$0xf]
    %v83 = vld [vmem:[#allocation2 + $0x4] sm:$0xf]
    %v84 = vld [vmem:[#allocation2 + $0x8] sm:$0xf]
    %v85 = vld [vmem:[#allocation2 + $0xc] sm:$0xf]
    %v86 = vld [vmem:[#allocation2 + $0x10] sm:$0xf]
    %v87 = vld [vmem:[#allocation2 + $0x14] sm:$0xf]
    %v88 = vld [vmem:[#allocation2 + $0x18] sm:$0xf]
    %v89 = vld [vmem:[#allocation2 + $0x1c] sm:$0xf]
    %v90 = vld [vmem:[#allocation2 + $0x20] sm:$0xf]
    %v91 = vld [vmem:[#allocation2 + $0x24] sm:$0xf]
    %v92 = vld [vmem:[#allocation2 + $0x28] sm:$0xf]
    %v93 = vld [vmem:[#allocation2 + $0x2c] sm:$0xf]
    %v94 = vld [vmem:[#allocation2 + $0x30] sm:$0xf]
    %v95 = vld [vmem:[#allocation2 + $0x34] sm:$0xf]
    %v96 = vld [vmem:[#allocation2 + $0x38] sm:$0xf]
    %v97 = vld [vmem:[#allocation2 + $0x3c] sm:$0xf]
    %v98 = vld [vmem:[#allocation5] sm:$0xff]
    %v99 = vld [vmem:[#allocation5 + $0x8] sm:$0xff]
    %v100 = vld [vmem:[#allocation5 + $0x10] sm:$0xff]
    %v101 = vld [vmem:[#allocation5 + $0x18] sm:$0xff]
    %v102 = vld [vmem:[#allocation5 + $0x20] sm:$0xff]
    %v103 = vld [vmem:[#allocation5 + $0x28] sm:$0xff]
    %v104 = vld [vmem:[#allocation5 + $0x30] sm:$0xff]
    %v105 = vld [vmem:[#allocation5 + $0x38] sm:$0xff]
    %v106 = vld [vmem:[#allocation5 + $0x40] sm:$0xff]
    %v107 = vld [vmem:[#allocation5 + $0x48] sm:$0xff]
    %v108 = vld [vmem:[#allocation5 + $0x50] sm:$0xff]
    %v109 = vld [vmem:[#allocation5 + $0x58] sm:$0xff]
    %v110 = vld [vmem:[#allocation5 + $0x60] sm:$0xff]
    %v111 = vld [vmem:[#allocation5 + $0x68] sm:$0xff]
    %v112 = vld [vmem:[#allocation5 + $0x70] sm:$0xff]
    %v113 = vld [vmem:[#allocation5 + $0x78] sm:$0xff]
    %v114 = vld [vmem:[#allocation7] sm:$0x3]
    %v116 = vperm.slane %v114, 0
    %v117 = vperm.slane %v114, 1
    %v136 = vunpack.c.l.b16 %v82
    %v137 = vunpack.c.l.b16 %v83
    %v138 = vunpack.c.l.b16 %v84
    %v139 = vunpack.c.l.b16 %v85
    %v140 = vunpack.c.l.b16 %v86
    %v141 = vunpack.c.l.b16 %v87
    %v142 = vunpack.c.l.b16 %v88
    %v143 = vunpack.c.l.b16 %v89
    %v144 = vunpack.c.l.b16 %v90
    %v145 = vunpack.c.l.b16 %v91
    %v146 = vunpack.c.l.b16 %v92
    %v147 = vunpack.c.l.b16 %v93
    %v148 = vunpack.c.l.b16 %v94
    %v149 = vunpack.c.l.b16 %v95
    %v150 = vunpack.c.l.b16 %v96
    %v151 = vunpack.c.l.b16 %v97
    %v152 = vpack.c.b16 %v137, %v136
    %v153 = vpack.c.b16 %v139, %v138
    %v154 = vpack.c.b16 %v141, %v140
    %v155 = vpack.c.b16 %v143, %v142
    %v156 = vpack.c.b16 %v145, %v144
    %v157 = vpack.c.b16 %v147, %v146
    %v158 = vpack.c.b16 %v149, %v148
    %v159 = vpack.c.b16 %v151, %v150
    %v184 = vunpack.c.l.b16 %v98
    %v185 = vunpack.c.h.b16 %v98
    %v186 = vunpack.c.l.b16 %v99
    %v187 = vunpack.c.h.b16 %v99
    %v188 = vunpack.c.l.b16 %v100
    %v189 = vunpack.c.h.b16 %v100
    %v190 = vunpack.c.l.b16 %v101
    %v191 = vunpack.c.h.b16 %v101
    %v192 = vunpack.c.l.b16 %v102
    %v193 = vunpack.c.h.b16 %v102
    %v194 = vunpack.c.l.b16 %v103
    %v195 = vunpack.c.h.b16 %v103
    %v196 = vunpack.c.l.b16 %v104
    %v197 = vunpack.c.h.b16 %v104
    %v198 = vunpack.c.l.b16 %v105
    %v199 = vunpack.c.h.b16 %v105
    %v200 = vunpack.c.l.b16 %v106
    %v201 = vunpack.c.h.b16 %v106
    %v202 = vunpack.c.l.b16 %v107
    %v203 = vunpack.c.h.b16 %v107
    %v204 = vunpack.c.l.b16 %v108
    %v205 = vunpack.c.h.b16 %v108
    %v206 = vunpack.c.l.b16 %v109
    %v207 = vunpack.c.h.b16 %v109
    %v208 = vunpack.c.l.b16 %v110
    %v209 = vunpack.c.h.b16 %v110
    %v210 = vunpack.c.l.b16 %v111
    %v211 = vunpack.c.h.b16 %v111
    %v212 = vunpack.c.l.b16 %v112
    %v213 = vunpack.c.h.b16 %v112
    %v214 = vunpack.c.l.b16 %v113
    %v215 = vunpack.c.h.b16 %v113
    %v216 = vpack.c.b16 %v186, %v184
    %v217 = vpack.c.b16 %v187, %v185
    %v218 = vpack.c.b16 %v190, %v188
    %v219 = vpack.c.b16 %v191, %v189
    %v220 = vpack.c.b16 %v194, %v192
    %v221 = vpack.c.b16 %v195, %v193
    %v222 = vpack.c.b16 %v198, %v196
    %v223 = vpack.c.b16 %v199, %v197
    %v224 = vpack.c.b16 %v202, %v200
    %v225 = vpack.c.b16 %v203, %v201
    %v226 = vpack.c.b16 %v206, %v204
    %v227 = vpack.c.b16 %v207, %v205
    %v228 = vpack.c.b16 %v210, %v208
    %v229 = vpack.c.b16 %v211, %v209
    %v230 = vpack.c.b16 %v214, %v212
    %v231 = vpack.c.b16 %v215, %v213
    %248 = vmatpush.bf16.msra.mxu0 %v230
    %249 = vmatpush.bf16.msra.mxu0 %v228
    %250 = vmatpush.bf16.msra.mxu0 %v226
    %251 = vmatpush.bf16.msra.mxu0 %v224
    %252 = vmatpush.bf16.msra.mxu0 %v222
    %253 = vmatpush.bf16.msra.mxu0 %v220
    %254 = vmatpush.bf16.msra.mxu0 %v218
    %255 = vmatpush.bf16.msra.mxu0 %v216
    %256 = vmatmul.bf16.gmra.mxu0 %v152
    %v257 = vpop.f32.mrf.mxu0
    %v258 = vadd.f32 %v116, %v257
    %v259 = vpop.f32.mrf.mxu0
    %v260 = vadd.f32 %v116, %v259
    %261 = vmatmul.bf16.gmra.mxu0 %v153
    %v262 = vpop.f32.mrf.mxu0
    %v263 = vadd.f32 %v116, %v262
    %v264 = vpop.f32.mrf.mxu0
    %v265 = vadd.f32 %v116, %v264
    %266 = vmatmul.bf16.gmra.mxu0 %v154
    %v267 = vpop.f32.mrf.mxu0
    %v268 = vadd.f32 %v116, %v267
    %v269 = vpop.f32.mrf.mxu0
    %v270 = vadd.f32 %v116, %v269
    %271 = vmatmul.bf16.gmra.mxu0 %v155
    %v272 = vpop.f32.mrf.mxu0
    %v273 = vadd.f32 %v116, %v272
    %v274 = vpop.f32.mrf.mxu0
    %v275 = vadd.f32 %v116, %v274
    %276 = vmatmul.bf16.gmra.mxu0 %v156
    %v277 = vpop.f32.mrf.mxu0
    %v278 = vadd.f32 %v116, %v277
    %v279 = vpop.f32.mrf.mxu0
    %v280 = vadd.f32 %v116, %v279
    %281 = vmatmul.bf16.gmra.mxu0 %v157
    %v282 = vpop.f32.mrf.mxu0
    %v283 = vadd.f32 %v116, %v282
    %v284 = vpop.f32.mrf.mxu0
    %v285 = vadd.f32 %v116, %v284
    %286 = vmatmul.bf16.gmra.mxu0 %v158
    %v287 = vpop.f32.mrf.mxu0
    %v288 = vadd.f32 %v116, %v287
    %v289 = vpop.f32.mrf.mxu0
    %v290 = vadd.f32 %v116, %v289
    %291 = vmatmul.bf16.gmra.mxu0 %v159
    %v292 = vpop.f32.mrf.mxu0
    %v293 = vadd.f32 %v116, %v292
    %v294 = vpop.f32.mrf.mxu0
    %v295 = vadd.f32 %v116, %v294
    %296 = vdwg.mxu0
    %297 = vmatpush.bf16.msra.mxu0 %v231
    %298 = vmatpush.bf16.msra.mxu0 %v229
    %299 = vmatpush.bf16.msra.mxu0 %v227
    %300 = vmatpush.bf16.msra.mxu0 %v225
    %301 = vmatpush.bf16.msra.mxu0 %v223
    %302 = vmatpush.bf16.msra.mxu0 %v221
    %303 = vmatpush.bf16.msra.mxu0 %v219
    %304 = vmatpush.bf16.msra.mxu0 %v217
    %305 = vmatmul.bf16.gmra.mxu0 %v152
    %v306 = vpop.f32.mrf.mxu0
    %v307 = vadd.f32 %v117, %v306
    %v308 = vpop.f32.mrf.mxu0
    %v309 = vadd.f32 %v117, %v308
    %310 = vmatmul.bf16.gmra.mxu0 %v153
    %v311 = vpop.f32.mrf.mxu0
    %v312 = vadd.f32 %v117, %v311
    %v313 = vpop.f32.mrf.mxu0
    %v314 = vadd.f32 %v117, %v313
    %315 = vmatmul.bf16.gmra.mxu0 %v154
    %v316 = vpop.f32.mrf.mxu0
    %v317 = vadd.f32 %v117, %v316
    %v318 = vpop.f32.mrf.mxu0
    %v319 = vadd.f32 %v117, %v318
    %320 = vmatmul.bf16.gmra.mxu0 %v155
    %v321 = vpop.f32.mrf.mxu0
    %v322 = vadd.f32 %v117, %v321
    %v323 = vpop.f32.mrf.mxu0
    %v324 = vadd.f32 %v117, %v323
    %325 = vmatmul.bf16.gmra.mxu0 %v156
    %v326 = vpop.f32.mrf.mxu0
    %v327 = vadd.f32 %v117, %v326
    %v328 = vpop.f32.mrf.mxu0
    %v329 = vadd.f32 %v117, %v328
    %330 = vmatmul.bf16.gmra.mxu0 %v157
    %v331 = vpop.f32.mrf.mxu0
    %v332 = vadd.f32 %v117, %v331
    %v333 = vpop.f32.mrf.mxu0
    %v334 = vadd.f32 %v117, %v333
    %335 = vmatmul.bf16.gmra.mxu0 %v158
    %v336 = vpop.f32.mrf.mxu0
    %v337 = vadd.f32 %v117, %v336
    %v338 = vpop.f32.mrf.mxu0
    %v339 = vadd.f32 %v117, %v338
    %340 = vmatmul.bf16.gmra.mxu0 %v159
    %v341 = vpop.f32.mrf.mxu0
    %v342 = vadd.f32 %v117, %v341
    %v343 = vpop.f32.mrf.mxu0
    %v344 = vadd.f32 %v117, %v343
    %345 = vdwg.mxu0
    %v346 = vmax.f32 %v258, 0.0
    %v347 = vmax.f32 %v307, 0.0
    %v348 = vmax.f32 %v260, 0.0
    %v349 = vmax.f32 %v309, 0.0
    %v350 = vmax.f32 %v263, 0.0
    %v351 = vmax.f32 %v312, 0.0
    %v352 = vmax.f32 %v265, 0.0
    %v353 = vmax.f32 %v314, 0.0
    %v354 = vmax.f32 %v268, 0.0
    %v355 = vmax.f32 %v317, 0.0
    %v356 = vmax.f32 %v270, 0.0
    %v357 = vmax.f32 %v319, 0.0
    %v358 = vmax.f32 %v273, 0.0
    %v359 = vmax.f32 %v322, 0.0
    %v360 = vmax.f32 %v275, 0.0
    %v361 = vmax.f32 %v324, 0.0
    %v362 = vmax.f32 %v278, 0.0
    %v363 = vmax.f32 %v327, 0.0
    %v364 = vmax.f32 %v280, 0.0
    %v365 = vmax.f32 %v329, 0.0
    %v366 = vmax.f32 %v283, 0.0
    %v367 = vmax.f32 %v332, 0.0
    %v368 = vmax.f32 %v285, 0.0
    %v369 = vmax.f32 %v334, 0.0
    %v370 = vmax.f32 %v288, 0.0
    %v371 = vmax.f32 %v337, 0.0
    %v372 = vmax.f32 %v290, 0.0
    %v373 = vmax.f32 %v339, 0.0
    %v374 = vmax.f32 %v293, 0.0
    %v375 = vmax.f32 %v342, 0.0
    %v376 = vmax.f32 %v295, 0.0
    %v377 = vmax.f32 %v344, 0.0
    %v378 = vpack.c.bf16 %v348, %v346
    %v379 = vpack.c.bf16 %v349, %v347
    %v380 = vpack.c.bf16 %v352, %v350
    %v381 = vpack.c.bf16 %v353, %v351
    %v382 = vpack.c.bf16 %v356, %v354
    %v383 = vpack.c.bf16 %v357, %v355
    %v384 = vpack.c.bf16 %v360, %v358
    %v385 = vpack.c.bf16 %v361, %v359
    %v386 = vpack.c.bf16 %v364, %v362
    %v387 = vpack.c.bf16 %v365, %v363
    %v388 = vpack.c.bf16 %v368, %v366
    %v389 = vpack.c.bf16 %v369, %v367
    %v390 = vpack.c.bf16 %v372, %v370
    %v391 = vpack.c.bf16 %v373, %v371
    %v392 = vpack.c.bf16 %v376, %v374
    %v393 = vpack.c.bf16 %v377, %v375
    %v394 = vld [vmem:[#allocation8] sm:$0xf]
    %v395 = vld [vmem:[#allocation8 + $0x4] sm:$0xf]
    %v396 = vld [vmem:[#allocation8 + $0x8] sm:$0xf]
    %v397 = vld [vmem:[#allocation8 + $0xc] sm:$0xf]
    %v398 = vld [vmem:[#allocation8 + $0x10] sm:$0xf]
    %v399 = vld [vmem:[#allocation8 + $0x14] sm:$0xf]
    %v400 = vld [vmem:[#allocation8 + $0x18] sm:$0xf]
    %v401 = vld [vmem:[#allocation8 + $0x1c] sm:$0xf]
    %v402 = vld [vmem:[#allocation8 + $0x20] sm:$0xf]
    %v403 = vld [vmem:[#allocation8 + $0x24] sm:$0xf]
    %v404 = vld [vmem:[#allocation8 + $0x28] sm:$0xf]
    %v405 = vld [vmem:[#allocation8 + $0x2c] sm:$0xf]
    %v406 = vld [vmem:[#allocation8 + $0x30] sm:$0xf]
    %v407 = vld [vmem:[#allocation8 + $0x34] sm:$0xf]
    %v408 = vld [vmem:[#allocation8 + $0x38] sm:$0xf]
    %v409 = vld [vmem:[#allocation8 + $0x3c] sm:$0xf]
    %v410 = vld [vmem:[#allocation8 + $0x40] sm:$0xf]
    %v411 = vld [vmem:[#allocation8 + $0x44] sm:$0xf]
    %v412 = vld [vmem:[#allocation8 + $0x48] sm:$0xf]
    %v413 = vld [vmem:[#allocation8 + $0x4c] sm:$0xf]
    %v414 = vld [vmem:[#allocation8 + $0x50] sm:$0xf]
    %v415 = vld [vmem:[#allocation8 + $0x54] sm:$0xf]
    %v416 = vld [vmem:[#allocation8 + $0x58] sm:$0xf]
    %v417 = vld [vmem:[#allocation8 + $0x5c] sm:$0xf]
    %v418 = vld [vmem:[#allocation8 + $0x60] sm:$0xf]
    %v419 = vld [vmem:[#allocation8 + $0x64] sm:$0xf]
    %v420 = vld [vmem:[#allocation8 + $0x68] sm:$0xf]
    %v421 = vld [vmem:[#allocation8 + $0x6c] sm:$0xf]
    %v422 = vld [vmem:[#allocation8 + $0x70] sm:$0xf]
    %v423 = vld [vmem:[#allocation8 + $0x74] sm:$0xf]
    %v424 = vld [vmem:[#allocation8 + $0x78] sm:$0xf]
    %v425 = vld [vmem:[#allocation8 + $0x7c] sm:$0xf]
    %v426 = vld [vmem:[%s4] sm:$0x1]
    %v428 = vperm.slane %v426, 0
    %v462 = vunpack.c.l.b16 %v394
    %v463 = vunpack.c.l.b16 %v395
    %v464 = vunpack.c.l.b16 %v396
    %v465 = vunpack.c.l.b16 %v397
    %v466 = vunpack.c.l.b16 %v398
    %v467 = vunpack.c.l.b16 %v399
    %v468 = vunpack.c.l.b16 %v400
    %v469 = vunpack.c.l.b16 %v401
    %v470 = vunpack.c.l.b16 %v402
    %v471 = vunpack.c.l.b16 %v403
    %v472 = vunpack.c.l.b16 %v404
    %v473 = vunpack.c.l.b16 %v405
    %v474 = vunpack.c.l.b16 %v406
    %v475 = vunpack.c.l.b16 %v407
    %v476 = vunpack.c.l.b16 %v408
    %v477 = vunpack.c.l.b16 %v409
    %v478 = vunpack.c.l.b16 %v410
    %v479 = vunpack.c.l.b16 %v411
    %v480 = vunpack.c.l.b16 %v412
    %v481 = vunpack.c.l.b16 %v413
    %v482 = vunpack.c.l.b16 %v414
    %v483 = vunpack.c.l.b16 %v415
    %v484 = vunpack.c.l.b16 %v416
    %v485 = vunpack.c.l.b16 %v417
    %v486 = vunpack.c.l.b16 %v418
    %v487 = vunpack.c.l.b16 %v419
    %v488 = vunpack.c.l.b16 %v420
    %v489 = vunpack.c.l.b16 %v421
    %v490 = vunpack.c.l.b16 %v422
    %v491 = vunpack.c.l.b16 %v423
    %v492 = vunpack.c.l.b16 %v424
    %v493 = vunpack.c.l.b16 %v425
    %v494 = vpack.c.b16 %v463, %v462
    %v495 = vpack.c.b16 %v465, %v464
    %v496 = vpack.c.b16 %v467, %v466
    %v497 = vpack.c.b16 %v469, %v468
    %v498 = vpack.c.b16 %v471, %v470
    %v499 = vpack.c.b16 %v473, %v472
    %v500 = vpack.c.b16 %v475, %v474
    %v501 = vpack.c.b16 %v477, %v476
    %v502 = vpack.c.b16 %v479, %v478
    %v503 = vpack.c.b16 %v481, %v480
    %v504 = vpack.c.b16 %v483, %v482
    %v505 = vpack.c.b16 %v485, %v484
    %v506 = vpack.c.b16 %v487, %v486
    %v507 = vpack.c.b16 %v489, %v488
    %v508 = vpack.c.b16 %v491, %v490
    %v509 = vpack.c.b16 %v493, %v492
    %526 = vmatpush.bf16.msra.mxu0 %v501
    %527 = vmatpush.bf16.msra.mxu0 %v500
    %528 = vmatpush.bf16.msra.mxu0 %v499
    %529 = vmatpush.bf16.msra.mxu0 %v498
    %530 = vmatpush.bf16.msra.mxu0 %v497
    %531 = vmatpush.bf16.msra.mxu0 %v496
    %532 = vmatpush.bf16.msra.mxu0 %v495
    %533 = vmatpush.bf16.msra.mxu0 %v494
    %534 = vmatmul.bf16.gmra.mxu0 %v378
    %v535 = vpop.f32.mrf.mxu0
    %v536 = vadd.f32 %v428, %v535
    %v537 = vpop.f32.mrf.mxu0
    %v538 = vadd.f32 %v428, %v537
    %539 = vmatmul.bf16.gmra.mxu0 %v380
    %v540 = vpop.f32.mrf.mxu0
    %v541 = vadd.f32 %v428, %v540
    %v542 = vpop.f32.mrf.mxu0
    %v543 = vadd.f32 %v428, %v542
    %544 = vmatmul.bf16.gmra.mxu0 %v382
    %v545 = vpop.f32.mrf.mxu0
    %v546 = vadd.f32 %v428, %v545
    %v547 = vpop.f32.mrf.mxu0
    %v548 = vadd.f32 %v428, %v547
    %549 = vmatmul.bf16.gmra.mxu0 %v384
    %v550 = vpop.f32.mrf.mxu0
    %v551 = vadd.f32 %v428, %v550
    %v552 = vpop.f32.mrf.mxu0
    %v553 = vadd.f32 %v428, %v552
    %554 = vmatmul.bf16.gmra.mxu0 %v386
    %v555 = vpop.f32.mrf.mxu0
    %v556 = vadd.f32 %v428, %v555
    %v557 = vpop.f32.mrf.mxu0
    %v558 = vadd.f32 %v428, %v557
    %559 = vmatmul.bf16.gmra.mxu0 %v388
    %v560 = vpop.f32.mrf.mxu0
    %v561 = vadd.f32 %v428, %v560
    %v562 = vpop.f32.mrf.mxu0
    %v563 = vadd.f32 %v428, %v562
    %564 = vmatmul.bf16.gmra.mxu0 %v390
    %v565 = vpop.f32.mrf.mxu0
    %v566 = vadd.f32 %v428, %v565
    %v567 = vpop.f32.mrf.mxu0
    %v568 = vadd.f32 %v428, %v567
    %569 = vmatmul.bf16.gmra.mxu0 %v392
    %v570 = vpop.f32.mrf.mxu0
    %v571 = vadd.f32 %v428, %v570
    %v572 = vpop.f32.mrf.mxu0
    %v573 = vadd.f32 %v428, %v572
    %574 = vdwg.mxu0
    %575 = vmatpush.bf16.msra.mxu0 %v509
    %576 = vmatpush.bf16.msra.mxu0 %v508
    %577 = vmatpush.bf16.msra.mxu0 %v507
    %578 = vmatpush.bf16.msra.mxu0 %v506
    %579 = vmatpush.bf16.msra.mxu0 %v505
    %580 = vmatpush.bf16.msra.mxu0 %v504
    %581 = vmatpush.bf16.msra.mxu0 %v503
    %582 = vmatpush.bf16.msra.mxu0 %v502
    %583 = vmatmul.bf16.gmra.mxu0 %v379
    %v584 = vpop.f32.mrf.mxu0
    %v585 = vadd.f32 %v536, %v584
    %v586 = vpop.f32.mrf.mxu0
    %v587 = vadd.f32 %v538, %v586
    %588 = vmatmul.bf16.gmra.mxu0 %v381
    %v589 = vpop.f32.mrf.mxu0
    %v590 = vadd.f32 %v541, %v589
    %v591 = vpop.f32.mrf.mxu0
    %v592 = vadd.f32 %v543, %v591
    %593 = vmatmul.bf16.gmra.mxu0 %v383
    %v594 = vpop.f32.mrf.mxu0
    %v595 = vadd.f32 %v546, %v594
    %v596 = vpop.f32.mrf.mxu0
    %v597 = vadd.f32 %v548, %v596
    %598 = vmatmul.bf16.gmra.mxu0 %v385
    %v599 = vpop.f32.mrf.mxu0
    %v600 = vadd.f32 %v551, %v599
    %v601 = vpop.f32.mrf.mxu0
    %v602 = vadd.f32 %v553, %v601
    %603 = vmatmul.bf16.gmra.mxu0 %v387
    %v604 = vpop.f32.mrf.mxu0
    %v605 = vadd.f32 %v556, %v604
    %v606 = vpop.f32.mrf.mxu0
    %v607 = vadd.f32 %v558, %v606
    %608 = vmatmul.bf16.gmra.mxu0 %v389
    %v609 = vpop.f32.mrf.mxu0
    %v610 = vadd.f32 %v561, %v609
    %v611 = vpop.f32.mrf.mxu0
    %v612 = vadd.f32 %v563, %v611
    %613 = vmatmul.bf16.gmra.mxu0 %v391
    %v614 = vpop.f32.mrf.mxu0
    %v615 = vadd.f32 %v566, %v614
    %v616 = vpop.f32.mrf.mxu0
    %v617 = vadd.f32 %v568, %v616
    %618 = vmatmul.bf16.gmra.mxu0 %v393
    %v619 = vpop.f32.mrf.mxu0
    %v620 = vadd.f32 %v571, %v619
    %v621 = vpop.f32.mrf.mxu0
    %v622 = vadd.f32 %v573, %v621
    %623 = vdwg.mxu0
    %624 = vst [vmem:[#allocation10] sm:$0xff] %v585
    %625 = vst [vmem:[#allocation10 + $0x8] sm:$0xff] %v587
    %626 = vst [vmem:[#allocation10 + $0x10] sm:$0xff] %v590
    %627 = vst [vmem:[#allocation10 + $0x18] sm:$0xff] %v592
    %628 = vst [vmem:[#allocation10 + $0x20] sm:$0xff] %v595
    %629 = vst [vmem:[#allocation10 + $0x28] sm:$0xff] %v597
    %630 = vst [vmem:[#allocation10 + $0x30] sm:$0xff] %v600
    %631 = vst [vmem:[#allocation10 + $0x38] sm:$0xff] %v602
    %632 = vst [vmem:[#allocation10 + $0x40] sm:$0xff] %v605
    %633 = vst [vmem:[#allocation10 + $0x48] sm:$0xff] %v607
    %634 = vst [vmem:[#allocation10 + $0x50] sm:$0xff] %v610
    %635 = vst [vmem:[#allocation10 + $0x58] sm:$0xff] %v612
    %636 = vst [vmem:[#allocation10 + $0x60] sm:$0xff] %v615
    %637 = vst [vmem:[#allocation10 + $0x68] sm:$0xff] %v617
    %638 = vst [vmem:[#allocation10 + $0x70] sm:$0xff] %v620
    %639 = vst [vmem:[#allocation10 + $0x78] sm:$0xff] %v622
    // Predicated region
    $region38: #{tpu_custom_call.1} parent=1 // pred_check
      _
    $region39: #{tpu_custom_call.1} parent=1 // pred_check_branch
      %641 = sbr.rel (0) target = $region41
    $region40: #{tpu_custom_call.1} parent=1 // pred_region
      %643 = vsyncadd [#allocation4], 0
      %s644 = sshll.u32 [#allocation10], 4
      %s645 = int_to_ptr.vmem [resolvable:$true] %s644
      %s646 = sshll.u32 %s5, 4
      %s647 = int_to_ptr.hbm [resolvable:$true] %s646
      %652 = dma.vmem_to_hbm [thread:$0]  %s645, 2048, %s647, [#allocation4], 128, 128, 8
    $region41: #{tpu_custom_call.1} parent=1 // pred_fallthru
      _
    // Predicated region
    $region42: #{tpu_custom_call.1} parent=1 // pred_check
      _
    $region43: #{tpu_custom_call.1} parent=1 // pred_check_branch
      %654 = sbr.rel (0) target = $region45
    $region44: #{tpu_custom_call.1} parent=1 // pred_region
      %656 = dma.done [#allocation4], 2048
    $region45: #{tpu_custom_call.1} parent=1 // pred_fallthru
      _
    %657 = vsyncpa [#allocation3], 1
    %658 = vsyncpa [#allocation6], 1
    %659 = vsyncpa [#allocation9], 1
    %660 = vsyncpa [#allocation4], 1

</llo_original>
